<compile_context>
chip_gen: v6e
topology: v6e:2x2x1
jax: 0.10.0
libtpu: 0.0.40
codegen_flags: <defaults>
</compile_context>

<pallas_src>
import functools

import jax
import jax.numpy as jnp
from jax.experimental import pallas as pl
from jax.experimental.pallas import tpu as pltpu


# --------------------------------------------------------------------------
# Pallas kernel: T GRU steps (one per grid iteration), weights VMEM-resident
# --------------------------------------------------------------------------
def _decode_kernel(ids_ref,                       # (T, B) int32, SMEM (prefetch)
                   emb_ref, emo_ref, h0_ref,      # (V,E) f32, (B,H) f32, (B,H) f32
                   w_rz_ref, w_in_ref, w_hn_ref,  # (E+H,2H) bf16, (E,H) bf16, (H,H) bf16
                   b_rz_ref, b_in_ref, b_hn_ref,  # (1,2H) f32, (1,H) f32, (1,H) f32
                   w_out_ref, b_out_ref,          # (H,V) bf16, (1,V) f32
                   logp_ref, hout_ref,            # (1,B,V) f32, (B,H) f32
                   x_scratch):                    # (B,E) f32 VMEM scratch
    t = pl.program_id(0)
    B, H = hout_ref.shape

    # hidden-state carry lives in the VMEM-resident output block
    @pl.when(t == 0)
    def _():
        hout_ref[...] = h0_ref[...]

    # Fused embedding lookup: B dynamic row loads from the VMEM-resident table
    # (token ids are scalars in SMEM via scalar prefetch).
    for b in range(B):
        x_scratch[b, :] = emb_ref[ids_ref[t, b]]
    x = x_scratch[...].astype(jnp.bfloat16)                      # (B, E)

    # last_hidden[:, :, :Z] += emotion_hidden  (emo_ref is zero-padded -> exact)
    h = hout_ref[...] + emo_ref[...]                             # (B, H) f32
    h_bf = h.astype(jnp.bfloat16)

    # r / z gates: one fused [x | h] dot, bf16 inputs, f32 accumulation
    xh = jnp.concatenate([x, h_bf], axis=-1)                     # (B, E+H)
    rz = jnp.dot(xh, w_rz_ref[...],
                 preferred_element_type=jnp.float32) + b_rz_ref[...]
    r = jax.nn.sigmoid(rz[:, :H])
    z = jax.nn.sigmoid(rz[:, H:])

    # n gate: n = tanh(W_in x + b_in + r * (W_hn h + b_hn))
    gi_n = jnp.dot(x, w_in_ref[...],
                   preferred_element_type=jnp.float32) + b_in_ref[...]
    gh_n = jnp.dot(h_bf, w_hn_ref[...],
                   preferred_element_type=jnp.float32) + b_hn_ref[...]
    n = jnp.tanh(gi_n + r * gh_n)

    h_new = (1.0 - z) * n + z * h                                # f32 blend
    hout_ref[...] = h_new

    # gru2out linear + log_softmax(dim=1)
    logits = (jnp.dot(h_new.astype(jnp.bfloat16), w_out_ref[...],
                      preferred_element_type=jnp.float32) + b_out_ref[...])
    m = jnp.max(logits, axis=-1, keepdims=True)
    shifted = logits - m
    lse = jnp.log(jnp.sum(jnp.exp(shifted), axis=-1, keepdims=True))
    logp_ref[0] = shifted - lse


# --------------------------------------------------------------------------
# Parameter preparation: canonical f32 params -> kernel layout (bf16 weights)
# --------------------------------------------------------------------------
def prepare_params(params):
    H = params["w_hh"].shape[0]
    w_ih, w_hh = params["w_ih"], params["w_hh"]
    return {
        # f32 table: dynamic single-row loads are cheapest/safest unpacked;
        # rows are cast to bf16 after the gather (numerically identical).
        "embedding": params["embedding"].astype(jnp.float32),
        "w_rz": jnp.concatenate(
            [w_ih[:, :2 * H], w_hh[:, :2 * H]], axis=0).astype(jnp.bfloat16),
        "w_in": w_ih[:, 2 * H:].astype(jnp.bfloat16),
        "w_hn": w_hh[:, 2 * H:].astype(jnp.bfloat16),
        "b_rz": (params["b_ih"][:, :2 * H]
                 + params["b_hh"][:, :2 * H]).astype(jnp.float32),
        "b_in": params["b_ih"][:, 2 * H:].astype(jnp.float32),
        "b_hn": params["b_hh"][:, 2 * H:].astype(jnp.float32),
        "w_out": params["w_out"].astype(jnp.bfloat16),
        "b_out": params["b_out"].astype(jnp.float32),
    }


# --------------------------------------------------------------------------
# Wrappers
# --------------------------------------------------------------------------
@functools.partial(jax.jit, static_argnames=("emotion_z_size",))
def generator_forward_seq(kparams, token_ids, emotion_hidden, last_hidden,
                          *, emotion_z_size):
    """Runs T teacher-forced Generator.forward steps in ONE pallas_call.

    token_ids:      (T, B) int32
    emotion_hidden: (B, emotion_z_size) f32
    last_hidden:    (1, B, H) f32 (PyTorch GRU hidden convention)
    Returns (log_probs (T, B, V), final hidden (1, B, H)).
    """
    T, B = token_ids.shape
    E = kparams["embedding"].shape[1]
    H = kparams["w_hn"].shape[0]
    V = kparams["w_out"].shape[1]
    assert emotion_z_size <= H

    h0 = last_hidden[0].astype(jnp.float32)                       # (B, H)
    emo_pad = jnp.zeros((B, H), jnp.float32).at[:, :emotion_z_size].set(
        emotion_hidden.astype(jnp.float32))

    ins = (kparams["embedding"], emo_pad, h0,
           kparams["w_rz"], kparams["w_in"], kparams["w_hn"],
           kparams["b_rz"], kparams["b_in"], kparams["b_hn"],
           kparams["w_out"], kparams["b_out"])

    def const(shape):
        # whole array, index ignores the time step -> DMA'd once, VMEM-resident
        return pl.BlockSpec(shape, lambda t, ids: (0,) * len(shape))

    logp, h_out = pl.pallas_call(
        _decode_kernel,
        out_shape=(jax.ShapeDtypeStruct((T, B, V), jnp.float32),
                   jax.ShapeDtypeStruct((B, H), jnp.float32)),
        grid_spec=pltpu.PrefetchScalarGridSpec(
            num_scalar_prefetch=1,
            grid=(T,),
            in_specs=[const(a.shape) for a in ins],
            out_specs=(pl.BlockSpec((1, B, V), lambda t, ids: (t, 0, 0)),
                       pl.BlockSpec((B, H), lambda t, ids: (0, 0))),
            scratch_shapes=[pltpu.VMEM((B, E), jnp.float32)]),
        compiler_params=pltpu.CompilerParams(
            dimension_semantics=("arbitrary",)),   # time axis is sequential
    )(token_ids.astype(jnp.int32), *ins)

    return logp, h_out[None]                                      # (1, B, H)


def generator_forward(kparams, token_ids, emotion_hidden, last_hidden,
                      *, emotion_z_size):
    """Single-step forward matching Generator.forward exactly.
    token_ids: (B,) -> returns (log_probs (B, V), hidden (1, B, H))."""
    logp, h = generator_forward_seq(kparams, token_ids[None, :],
                                    emotion_hidden, last_hidden,
                                    emotion_z_size=emotion_z_size)
    return logp[0], h


# --------------------------------------------------------------------------
# Pure-JAX reference mirroring the kernel's mixed precision (bf16 MXU inputs,
# f32 accumulation and gate math) for the correctness check
# --------------------------------------------------------------------------
def generator_forward_seq_ref(params, token_ids, emotion_hidden, last_hidden,
                              *, emotion_z_size):
    H = params["w_hh"].shape[0]
    emb_bf = params["embedding"].astype(jnp.bfloat16)
    w_ih_bf = params["w_ih"].astype(jnp.bfloat16)
    w_hh_bf = params["w_hh"].astype(jnp.bfloat16)
    w_out_bf = params["w_out"].astype(jnp.bfloat16)
    h = last_hidden[0]
    outs = []
    for t in range(token_ids.shape[0]):
        x = emb_bf[token_ids[t]]
        h = h.at[:, :emotion_z_size].add(emotion_hidden)
        h_bf = h.astype(jnp.bfloat16)
        gi = jnp.dot(x, w_ih_bf, preferred_element_type=jnp.float32) + params["b_ih"]
        gh = jnp.dot(h_bf, w_hh_bf, preferred_element_type=jnp.float32) + params["b_hh"]
        r = jax.nn.sigmoid(gi[:, :H] + gh[:, :H])
        z = jax.nn.sigmoid(gi[:, H:2 * H] + gh[:, H:2 * H])
        n = jnp.tanh(gi[:, 2 * H:] + r * gh[:, 2 * H:])
        h = (1.0 - z) * n + z * h
        logits = (jnp.dot(h.astype(jnp.bfloat16), w_out_bf,
                          preferred_element_type=jnp.float32) + params["b_out"])
        outs.append(jax.nn.log_softmax(logits, axis=-1))
    return jnp.stack(outs, axis=0), h[None]


# --------------------------------------------------------------------------
# Deterministic parameter init (shapes follow the module's __init__)
# --------------------------------------------------------------------------
def init_params(key, vocab_size, embedding_dim, hidden_dim):
    ks = jax.random.split(key, 7)
    s = 0.05
    return {
        "embedding": s * jax.random.normal(ks[0], (vocab_size, embedding_dim),
                                           jnp.float32),
        # transposed vs. PyTorch: (in, 3H) / (H, 3H), gate order r|z|n
        "w_ih": s * jax.random.normal(ks[1], (embedding_dim, 3 * hidden_dim),
                                      jnp.float32),
        "w_hh": s * jax.random.normal(ks[2], (hidden_dim, 3 * hidden_dim),
                                      jnp.float32),
        "b_ih": s * jax.random.normal(ks[3], (1, 3 * hidden_dim), jnp.float32),
        "b_hh": s * jax.random.normal(ks[4], (1, 3 * hidden_dim), jnp.float32),
        "w_out": s * jax.random.normal(ks[5], (hidden_dim, vocab_size),
                                       jnp.float32),
        "b_out": s * jax.random.normal(ks[6], (1, vocab_size), jnp.float32),
    }


if __name__ == "__main__":
    # Small, TPU-friendly shapes consistent with the module
    batch = 8
    vocab_size = 256
    embedding_dim = 128
    hidden_dim = 128
    emotion_z_size = 32
    seq_len = 8          # teacher-forced decode steps fused into one kernel

    key = jax.random.PRNGKey(0)
    kp, k1, k2, k3 = jax.random.split(key, 4)

    params = init_params(kp, vocab_size, embedding_dim, hidden_dim)
    kparams = prepare_params(params)

    token_seq = jax.random.randint(k1, (seq_len, batch), 0, vocab_size, jnp.int32)
    emotion_hidden = 0.1 * jax.random.normal(k2, (batch, emotion_z_size),
                                             jnp.float32)
    last_hidden = 0.1 * jax.random.normal(k3, (1, batch, hidden_dim),
                                          jnp.float32)

    # --- single-step forward (exactly Generator.forward) ---
    logp1, h1 = generator_forward(kparams, token_seq[0], emotion_hidden,
                                  last_hidden, emotion_z_size=emotion_z_size)
    jax.block_until_ready((logp1, h1))
    logp1_ref, h1_ref = generator_forward_seq_ref(
        params, token_seq[:1], emotion_hidden, last_hidden,
        emotion_z_size=emotion_z_size)
    assert logp1.shape == (batch, vocab_size)
    assert h1.shape == (1, batch, hidden_dim)
    assert jnp.allclose(logp1, logp1_ref[0], atol=1e-3), "step log_softmax mismatch"
    assert jnp.allclose(h1, h1_ref, atol=1e-3), "step hidden mismatch"

    # --- seq_len forwards fused into one pallas_call (weights stay in VMEM) ---
    logp, h = generator_forward_seq(kparams, token_seq, emotion_hidden,
                                    last_hidden, emotion_z_size=emotion_z_size)
    jax.block_until_ready((logp, h))
    logp_ref, h_ref = generator_forward_seq_ref(
        params, token_seq, emotion_hidden, last_hidden,
        emotion_z_size=emotion_z_size)
    assert logp.shape == (seq_len, batch, vocab_size)
    assert h.shape == (1, batch, hidden_dim)
    assert jnp.allclose(logp, logp_ref, atol=1e-3), "seq log_softmax mismatch"
    assert jnp.allclose(h, h_ref, atol=1e-3), "seq hidden mismatch"

    print("KERNEL_OK")
</pallas_src>

<mosaic_0001>
module attributes {stable_mosaic.version = 11 : i64} {
  func.func @_decode_kernel(%arg0: i32, %arg1: memref<1x8xi32, #tpu.memory_space<smem>>, %arg2: memref<256x128xf32, #tpu.memory_space<vmem>>, %arg3: memref<8x128xf32, #tpu.memory_space<vmem>>, %arg4: memref<8x128xf32, #tpu.memory_space<vmem>>, %arg5: memref<256x256xbf16, #tpu.memory_space<vmem>>, %arg6: memref<128x128xbf16, #tpu.memory_space<vmem>>, %arg7: memref<128x128xbf16, #tpu.memory_space<vmem>>, %arg8: memref<1x256xf32, #tpu.memory_space<vmem>>, %arg9: memref<1x128xf32, #tpu.memory_space<vmem>>, %arg10: memref<1x128xf32, #tpu.memory_space<vmem>>, %arg11: memref<128x256xbf16, #tpu.memory_space<vmem>>, %arg12: memref<1x256xf32, #tpu.memory_space<vmem>>, %arg13: memref<1x8x256xf32, #tpu.memory_space<vmem>>, %arg14: memref<8x128xf32, #tpu.memory_space<vmem>>, %arg15: memref<8x128xf32, #tpu.memory_space<vmem>>) attributes {dimension_semantics = [#tpu.dimension_semantics<arbitrary>], iteration_bounds = array<i64: 1>, scalar_prefetch = 1 : i64, scratch_operands = 1 : i64, tpu.core_type = #tpu.core_type<tc>, window_params = [{pipeline_mode = #tpu.pipeline_mode<synchronous>, transform_indices = @transform_0, window_bounds = array<i64: 256, 128>}, {pipeline_mode = #tpu.pipeline_mode<synchronous>, transform_indices = @transform_1, window_bounds = array<i64: 8, 128>}, {pipeline_mode = #tpu.pipeline_mode<synchronous>, transform_indices = @transform_2, window_bounds = array<i64: 8, 128>}, {pipeline_mode = #tpu.pipeline_mode<synchronous>, transform_indices = @transform_3, window_bounds = array<i64: 256, 256>}, {pipeline_mode = #tpu.pipeline_mode<synchronous>, transform_indices = @transform_4, window_bounds = array<i64: 128, 128>}, {pipeline_mode = #tpu.pipeline_mode<synchronous>, transform_indices = @transform_5, window_bounds = array<i64: 128, 128>}, {pipeline_mode = #tpu.pipeline_mode<synchronous>, transform_indices = @transform_6, window_bounds = array<i64: 1, 256>}, {pipeline_mode = #tpu.pipeline_mode<synchronous>, transform_indices = @transform_7, window_bounds = array<i64: 1, 128>}, {pipeline_mode = #tpu.pipeline_mode<synchronous>, transform_indices = @transform_8, window_bounds = array<i64: 1, 128>}, {pipeline_mode = #tpu.pipeline_mode<synchronous>, transform_indices = @transform_9, window_bounds = array<i64: 128, 256>}, {pipeline_mode = #tpu.pipeline_mode<synchronous>, transform_indices = @transform_10, window_bounds = array<i64: 1, 256>}, {transform_indices = @transform_11, window_bounds = array<i64: 1, 8, 256>}, {pipeline_mode = #tpu.pipeline_mode<synchronous>, transform_indices = @transform_12, window_bounds = array<i64: 8, 128>}]} {
    %c0_i32 = arith.constant 0 : i32
    %0 = arith.cmpi eq, %arg0, %c0_i32 : i32
    %1 = arith.extui %0 : i1 to i32
    %c0_i32_0 = arith.constant 0 : i32
    %2 = arith.cmpi ne, %1, %c0_i32_0 : i32
    scf.if %2 {
      %c0_60 = arith.constant 0 : index
      %c0_61 = arith.constant 0 : index
      %129 = vector.load %arg4[%c0_60, %c0_61] : memref<8x128xf32, #tpu.memory_space<vmem>>, vector<8x128xf32>
      %c0_62 = arith.constant 0 : index
      %c0_63 = arith.constant 0 : index
      %130 = vector.load %arg14[%c0_62, %c0_63] : memref<8x128xf32, #tpu.memory_space<vmem>>, vector<8x128xf32>
      tpu.vector_store %arg14[%c0_62, %c0_63], %129 {strides = array<i32>} : memref<8x128xf32, #tpu.memory_space<vmem>>, vector<8x128xf32>,
    } else {
    }
    %3 = arith.index_cast %arg0 : i32 to index
    %c0 = arith.constant 0 : index
    %4 = memref.load %arg1[%3, %c0] : memref<1x8xi32, #tpu.memory_space<smem>>
    %5 = arith.index_cast %4 : i32 to index
    %c0_1 = arith.constant 0 : index
    %6 = vector.load %arg2[%5, %c0_1] : memref<256x128xf32, #tpu.memory_space<vmem>>, vector<1x128xf32>
    %7 = vector.shape_cast %6 : vector<1x128xf32> to vector<128xf32>
    %c0_2 = arith.constant 0 : index
    %c0_3 = arith.constant 0 : index
    %8 = vector.load %arg15[%c0_2, %c0_3] : memref<8x128xf32, #tpu.memory_space<vmem>>, vector<1x128xf32>
    %9 = vector.shape_cast %8 : vector<1x128xf32> to vector<128xf32>
    %10 = vector.shape_cast %7 : vector<128xf32> to vector<1x128xf32>
    tpu.vector_store %arg15[%c0_2, %c0_3], %10 {strides = array<i32>} : memref<8x128xf32, #tpu.memory_space<vmem>>, vector<1x128xf32>,
    %11 = arith.index_cast %arg0 : i32 to index
    %c1 = arith.constant 1 : index
    %12 = memref.load %arg1[%11, %c1] : memref<1x8xi32, #tpu.memory_space<smem>>
    %13 = arith.index_cast %12 : i32 to index
    %c0_4 = arith.constant 0 : index
    %14 = vector.load %arg2[%13, %c0_4] : memref<256x128xf32, #tpu.memory_space<vmem>>, vector<1x128xf32>
    %15 = vector.shape_cast %14 : vector<1x128xf32> to vector<128xf32>
    %c1_5 = arith.constant 1 : index
    %c0_6 = arith.constant 0 : index
    %16 = vector.load %arg15[%c1_5, %c0_6] : memref<8x128xf32, #tpu.memory_space<vmem>>, vector<1x128xf32>
    %17 = vector.shape_cast %16 : vector<1x128xf32> to vector<128xf32>
    %18 = vector.shape_cast %15 : vector<128xf32> to vector<1x128xf32>
    tpu.vector_store %arg15[%c1_5, %c0_6], %18 {strides = array<i32>} : memref<8x128xf32, #tpu.memory_space<vmem>>, vector<1x128xf32>,
    %19 = arith.index_cast %arg0 : i32 to index
    %c2 = arith.constant 2 : index
    %20 = memref.load %arg1[%19, %c2] : memref<1x8xi32, #tpu.memory_space<smem>>
    %21 = arith.index_cast %20 : i32 to index
    %c0_7 = arith.constant 0 : index
    %22 = vector.load %arg2[%21, %c0_7] : memref<256x128xf32, #tpu.memory_space<vmem>>, vector<1x128xf32>
    %23 = vector.shape_cast %22 : vector<1x128xf32> to vector<128xf32>
    %c2_8 = arith.constant 2 : index
    %c0_9 = arith.constant 0 : index
    %24 = vector.load %arg15[%c2_8, %c0_9] : memref<8x128xf32, #tpu.memory_space<vmem>>, vector<1x128xf32>
    %25 = vector.shape_cast %24 : vector<1x128xf32> to vector<128xf32>
    %26 = vector.shape_cast %23 : vector<128xf32> to vector<1x128xf32>
    tpu.vector_store %arg15[%c2_8, %c0_9], %26 {strides = array<i32>} : memref<8x128xf32, #tpu.memory_space<vmem>>, vector<1x128xf32>,
    %27 = arith.index_cast %arg0 : i32 to index
    %c3 = arith.constant 3 : index
    %28 = memref.load %arg1[%27, %c3] : memref<1x8xi32, #tpu.memory_space<smem>>
    %29 = arith.index_cast %28 : i32 to index
    %c0_10 = arith.constant 0 : index
    %30 = vector.load %arg2[%29, %c0_10] : memref<256x128xf32, #tpu.memory_space<vmem>>, vector<1x128xf32>
    %31 = vector.shape_cast %30 : vector<1x128xf32> to vector<128xf32>
    %c3_11 = arith.constant 3 : index
    %c0_12 = arith.constant 0 : index
    %32 = vector.load %arg15[%c3_11, %c0_12] : memref<8x128xf32, #tpu.memory_space<vmem>>, vector<1x128xf32>
    %33 = vector.shape_cast %32 : vector<1x128xf32> to vector<128xf32>
    %34 = vector.shape_cast %31 : vector<128xf32> to vector<1x128xf32>
    tpu.vector_store %arg15[%c3_11, %c0_12], %34 {strides = array<i32>} : memref<8x128xf32, #tpu.memory_space<vmem>>, vector<1x128xf32>,
    %35 = arith.index_cast %arg0 : i32 to index
    %c4 = arith.constant 4 : index
    %36 = memref.load %arg1[%35, %c4] : memref<1x8xi32, #tpu.memory_space<smem>>
    %37 = arith.index_cast %36 : i32 to index
    %c0_13 = arith.constant 0 : index
    %38 = vector.load %arg2[%37, %c0_13] : memref<256x128xf32, #tpu.memory_space<vmem>>, vector<1x128xf32>
    %39 = vector.shape_cast %38 : vector<1x128xf32> to vector<128xf32>
    %c4_14 = arith.constant 4 : index
    %c0_15 = arith.constant 0 : index
    %40 = vector.load %arg15[%c4_14, %c0_15] : memref<8x128xf32, #tpu.memory_space<vmem>>, vector<1x128xf32>
    %41 = vector.shape_cast %40 : vector<1x128xf32> to vector<128xf32>
    %42 = vector.shape_cast %39 : vector<128xf32> to vector<1x128xf32>
    tpu.vector_store %arg15[%c4_14, %c0_15], %42 {strides = array<i32>} : memref<8x128xf32, #tpu.memory_space<vmem>>, vector<1x128xf32>,
    %43 = arith.index_cast %arg0 : i32 to index
    %c5 = arith.constant 5 : index
    %44 = memref.load %arg1[%43, %c5] : memref<1x8xi32, #tpu.memory_space<smem>>
    %45 = arith.index_cast %44 : i32 to index
    %c0_16 = arith.constant 0 : index
    %46 = vector.load %arg2[%45, %c0_16] : memref<256x128xf32, #tpu.memory_space<vmem>>, vector<1x128xf32>
    %47 = vector.shape_cast %46 : vector<1x128xf32> to vector<128xf32>
    %c5_17 = arith.constant 5 : index
    %c0_18 = arith.constant 0 : index
    %48 = vector.load %arg15[%c5_17, %c0_18] : memref<8x128xf32, #tpu.memory_space<vmem>>, vector<1x128xf32>
    %49 = vector.shape_cast %48 : vector<1x128xf32> to vector<128xf32>
    %50 = vector.shape_cast %47 : vector<128xf32> to vector<1x128xf32>
    tpu.vector_store %arg15[%c5_17, %c0_18], %50 {strides = array<i32>} : memref<8x128xf32, #tpu.memory_space<vmem>>, vector<1x128xf32>,
    %51 = arith.index_cast %arg0 : i32 to index
    %c6 = arith.constant 6 : index
    %52 = memref.load %arg1[%51, %c6] : memref<1x8xi32, #tpu.memory_space<smem>>
    %53 = arith.index_cast %52 : i32 to index
    %c0_19 = arith.constant 0 : index
    %54 = vector.load %arg2[%53, %c0_19] : memref<256x128xf32, #tpu.memory_space<vmem>>, vector<1x128xf32>
    %55 = vector.shape_cast %54 : vector<1x128xf32> to vector<128xf32>
    %c6_20 = arith.constant 6 : index
    %c0_21 = arith.constant 0 : index
    %56 = vector.load %arg15[%c6_20, %c0_21] : memref<8x128xf32, #tpu.memory_space<vmem>>, vector<1x128xf32>
    %57 = vector.shape_cast %56 : vector<1x128xf32> to vector<128xf32>
    %58 = vector.shape_cast %55 : vector<128xf32> to vector<1x128xf32>
    tpu.vector_store %arg15[%c6_20, %c0_21], %58 {strides = array<i32>} : memref<8x128xf32, #tpu.memory_space<vmem>>, vector<1x128xf32>,
    %59 = arith.index_cast %arg0 : i32 to index
    %c7 = arith.constant 7 : index
    %60 = memref.load %arg1[%59, %c7] : memref<1x8xi32, #tpu.memory_space<smem>>
    %61 = arith.index_cast %60 : i32 to index
    %c0_22 = arith.constant 0 : index
    %62 = vector.load %arg2[%61, %c0_22] : memref<256x128xf32, #tpu.memory_space<vmem>>, vector<1x128xf32>
    %63 = vector.shape_cast %62 : vector<1x128xf32> to vector<128xf32>
    %c7_23 = arith.constant 7 : index
    %c0_24 = arith.constant 0 : index
    %64 = vector.load %arg15[%c7_23, %c0_24] : memref<8x128xf32, #tpu.memory_space<vmem>>, vector<1x128xf32>
    %65 = vector.shape_cast %64 : vector<1x128xf32> to vector<128xf32>
    %66 = vector.shape_cast %63 : vector<128xf32> to vector<1x128xf32>
    tpu.vector_store %arg15[%c7_23, %c0_24], %66 {strides = array<i32>} : memref<8x128xf32, #tpu.memory_space<vmem>>, vector<1x128xf32>,
    %c0_25 = arith.constant 0 : index
    %c0_26 = arith.constant 0 : index
    %67 = vector.load %arg15[%c0_25, %c0_26] : memref<8x128xf32, #tpu.memory_space<vmem>>, vector<8x128xf32>
    %68 = arith.truncf %67 : vector<8x128xf32> to vector<8x128xbf16>
    %c0_27 = arith.constant 0 : index
    %c0_28 = arith.constant 0 : index
    %69 = vector.load %arg14[%c0_27, %c0_28] : memref<8x128xf32, #tpu.memory_space<vmem>>, vector<8x128xf32>
    %c0_29 = arith.constant 0 : index
    %c0_30 = arith.constant 0 : index
    %70 = vector.load %arg3[%c0_29, %c0_30] : memref<8x128xf32, #tpu.memory_space<vmem>>, vector<8x128xf32>
    %71 = arith.addf %69, %70 : vector<8x128xf32>
    %72 = arith.truncf %71 : vector<8x128xf32> to vector<8x128xbf16>
    %73 = tpu.concatenate %68, %72 in 1 : vector<8x128xbf16>, vector<8x128xbf16> -> vector<8x256xbf16>
    %c0_31 = arith.constant 0 : index
    %c0_32 = arith.constant 0 : index
    %74 = vector.load %arg5[%c0_31, %c0_32] : memref<256x256xbf16, #tpu.memory_space<vmem>>, vector<256x256xbf16>
    %cst = arith.constant dense<0.000000e+00> : vector<8x256xf32>
    %75 = tpu.matmul %73, %74, %cst {dimension_numbers = #tpu.dot_dimension_numbers<[1], [0], [0], [1], [0, 0, 1, 1], [], []>} : vector<8x256xbf16>, vector<256x256xbf16>, vector<8x256xf32> -> vector<8x256xf32>
    %c0_33 = arith.constant 0 : index
    %c0_34 = arith.constant 0 : index
    %76 = vector.load %arg8[%c0_33, %c0_34] : memref<1x256xf32, #tpu.memory_space<vmem>>, vector<1x256xf32>
    %77 = vector.broadcast %76 : vector<1x256xf32> to vector<8x256xf32>
    %78 = arith.addf %75, %77 : vector<8x256xf32>
    %79 = vector.extract_strided_slice %78 {offsets = [0, 0], sizes = [8, 128], strides = [1, 1]} : vector<8x256xf32> to vector<8x128xf32>
    %80 = arith.negf %79 : vector<8x128xf32>
    %81 = math.exp %80 : vector<8x128xf32>
    %cst_35 = arith.constant 1.000000e+00 : f32
    %82 = vector.broadcast %cst_35 : f32 to vector<8x128xf32>
    %83 = arith.addf %82, %81 : vector<8x128xf32>
    %84 = arith.divf %82, %83 : vector<8x128xf32>
    %85 = vector.extract_strided_slice %78 {offsets = [0, 128], sizes = [8, 128], strides = [1, 1]} : vector<8x256xf32> to vector<8x128xf32>
    %86 = arith.negf %85 : vector<8x128xf32>
    %87 = math.exp %86 : vector<8x128xf32>
    %cst_36 = arith.constant 1.000000e+00 : f32
    %88 = vector.broadcast %cst_36 : f32 to vector<8x128xf32>
    %89 = arith.addf %88, %87 : vector<8x128xf32>
    %90 = arith.divf %88, %89 : vector<8x128xf32>
    %c0_37 = arith.constant 0 : index
    %c0_38 = arith.constant 0 : index
    %91 = vector.load %arg6[%c0_37, %c0_38] : memref<128x128xbf16, #tpu.memory_space<vmem>>, vector<128x128xbf16>
    %cst_39 = arith.constant dense<0.000000e+00> : vector<8x128xf32>
    %92 = tpu.matmul %68, %91, %cst_39 {dimension_numbers = #tpu.dot_dimension_numbers<[1], [0], [0], [1], [0, 0, 1, 1], [], []>} : vector<8x128xbf16>, vector<128x128xbf16>, vector<8x128xf32> -> vector<8x128xf32>
    %c0_40 = arith.constant 0 : index
    %c0_41 = arith.constant 0 : index
    %93 = vector.load %arg9[%c0_40, %c0_41] : memref<1x128xf32, #tpu.memory_space<vmem>>, vector<1x128xf32>
    %94 = vector.broadcast %93 : vector<1x128xf32> to vector<8x128xf32>
    %95 = arith.addf %92, %94 : vector<8x128xf32>
    %c0_42 = arith.constant 0 : index
    %c0_43 = arith.constant 0 : index
    %96 = vector.load %arg7[%c0_42, %c0_43] : memref<128x128xbf16, #tpu.memory_space<vmem>>, vector<128x128xbf16>
    %cst_44 = arith.constant dense<0.000000e+00> : vector<8x128xf32>
    %97 = tpu.matmul %72, %96, %cst_44 {dimension_numbers = #tpu.dot_dimension_numbers<[1], [0], [0], [1], [0, 0, 1, 1], [], []>} : vector<8x128xbf16>, vector<128x128xbf16>, vector<8x128xf32> -> vector<8x128xf32>
    %c0_45 = arith.constant 0 : index
    %c0_46 = arith.constant 0 : index
    %98 = vector.load %arg10[%c0_45, %c0_46] : memref<1x128xf32, #tpu.memory_space<vmem>>, vector<1x128xf32>
    %99 = vector.broadcast %98 : vector<1x128xf32> to vector<8x128xf32>
    %100 = arith.addf %97, %99 : vector<8x128xf32>
    %101 = arith.mulf %84, %100 : vector<8x128xf32>
    %102 = arith.addf %95, %101 : vector<8x128xf32>
    %103 = math.tanh %102 : vector<8x128xf32>
    %cst_47 = arith.constant 1.000000e+00 : f32
    %104 = vector.broadcast %cst_47 : f32 to vector<8x128xf32>
    %105 = arith.subf %104, %90 : vector<8x128xf32>
    %106 = arith.mulf %105, %103 : vector<8x128xf32>
    %107 = arith.mulf %90, %71 : vector<8x128xf32>
    %108 = arith.addf %106, %107 : vector<8x128xf32>
    %c0_48 = arith.constant 0 : index
    %c0_49 = arith.constant 0 : index
    %109 = vector.load %arg14[%c0_48, %c0_49] : memref<8x128xf32, #tpu.memory_space<vmem>>, vector<8x128xf32>
    tpu.vector_store %arg14[%c0_48, %c0_49], %108 {strides = array<i32>} : memref<8x128xf32, #tpu.memory_space<vmem>>, vector<8x128xf32>,
    %110 = arith.truncf %108 : vector<8x128xf32> to vector<8x128xbf16>
    %c0_50 = arith.constant 0 : index
    %c0_51 = arith.constant 0 : index
    %111 = vector.load %arg11[%c0_50, %c0_51] : memref<128x256xbf16, #tpu.memory_space<vmem>>, vector<128x256xbf16>
    %cst_52 = arith.constant dense<0.000000e+00> : vector<8x256xf32>
    %112 = tpu.matmul %110, %111, %cst_52 {dimension_numbers = #tpu.dot_dimension_numbers<[1], [0], [0], [1], [0, 0, 1, 1], [], []>} : vector<8x128xbf16>, vector<128x256xbf16>, vector<8x256xf32> -> vector<8x256xf32>
    %c0_53 = arith.constant 0 : index
    %c0_54 = arith.constant 0 : index
    %113 = vector.load %arg12[%c0_53, %c0_54] : memref<1x256xf32, #tpu.memory_space<vmem>>, vector<1x256xf32>
    %114 = vector.broadcast %113 : vector<1x256xf32> to vector<8x256xf32>
    %115 = arith.addf %112, %114 : vector<8x256xf32>
    %cst_55 = arith.constant dense<0xFF800000> : vector<8xf32>
    %116 = vector.multi_reduction <maximumf>, %115, %cst_55 [1] : vector<8x256xf32> to vector<8xf32>
    %117 = vector.shape_cast %116 : vector<8xf32> to vector<8x1xf32>
    %118 = vector.broadcast %117 : vector<8x1xf32> to vector<8x256xf32>
    %119 = arith.subf %115, %118 : vector<8x256xf32>
    %120 = math.exp %119 : vector<8x256xf32>
    %cst_56 = arith.constant dense<0.000000e+00> : vector<8xf32>
    %121 = vector.multi_reduction <add>, %120, %cst_56 [1] : vector<8x256xf32> to vector<8xf32>
    %122 = vector.shape_cast %121 : vector<8xf32> to vector<8x1xf32>
    %123 = math.log %122 : vector<8x1xf32>
    %124 = vector.broadcast %123 : vector<8x1xf32> to vector<8x256xf32>
    %125 = arith.subf %119, %124 : vector<8x256xf32>
    %c0_57 = arith.constant 0 : index
    %c0_58 = arith.constant 0 : index
    %c0_59 = arith.constant 0 : index
    %126 = vector.load %arg13[%c0_57, %c0_58, %c0_59] : memref<1x8x256xf32, #tpu.memory_space<vmem>>, vector<1x8x256xf32>
    %127 = vector.shape_cast %126 : vector<1x8x256xf32> to vector<8x256xf32>
    %128 = vector.shape_cast %125 : vector<8x256xf32> to vector<1x8x256xf32>
    tpu.vector_store %arg13[%c0_57, %c0_58, %c0_59], %128 {strides = array<i32>} : memref<1x8x256xf32, #tpu.memory_space<vmem>>, vector<1x8x256xf32>,
    return
  }
  func.func @transform_0(%arg0: i32, %arg1: memref<1x8xi32, #tpu.memory_space<smem>>) -> (i32, i32) {
    %c0_i32 = arith.constant 0 : i32
    %c0_i32_0 = arith.constant 0 : i32
    %c0_i32_1 = arith.constant 0 : i32
    return %c0_i32, %c0_i32_0 : i32, i32
  }
  func.func @transform_1(%arg0: i32, %arg1: memref<1x8xi32, #tpu.memory_space<smem>>) -> (i32, i32) {
    %c0_i32 = arith.constant 0 : i32
    %c0_i32_0 = arith.constant 0 : i32
    %c0_i32_1 = arith.constant 0 : i32
    return %c0_i32, %c0_i32_0 : i32, i32
  }
  func.func @transform_2(%arg0: i32, %arg1: memref<1x8xi32, #tpu.memory_space<smem>>) -> (i32, i32) {
    %c0_i32 = arith.constant 0 : i32
    %c0_i32_0 = arith.constant 0 : i32
    %c0_i32_1 = arith.constant 0 : i32
    return %c0_i32, %c0_i32_0 : i32, i32
  }
  func.func @transform_3(%arg0: i32, %arg1: memref<1x8xi32, #tpu.memory_space<smem>>) -> (i32, i32) {
    %c0_i32 = arith.constant 0 : i32
    %c0_i32_0 = arith.constant 0 : i32
    %c0_i32_1 = arith.constant 0 : i32
    return %c0_i32, %c0_i32_0 : i32, i32
  }
  func.func @transform_4(%arg0: i32, %arg1: memref<1x8xi32, #tpu.memory_space<smem>>) -> (i32, i32) {
    %c0_i32 = arith.constant 0 : i32
    %c0_i32_0 = arith.constant 0 : i32
    %c0_i32_1 = arith.constant 0 : i32
    return %c0_i32, %c0_i32_0 : i32, i32
  }
  func.func @transform_5(%arg0: i32, %arg1: memref<1x8xi32, #tpu.memory_space<smem>>) -> (i32, i32) {
    %c0_i32 = arith.constant 0 : i32
    %c0_i32_0 = arith.constant 0 : i32
    %c0_i32_1 = arith.constant 0 : i32
    return %c0_i32, %c0_i32_0 : i32, i32
  }
  func.func @transform_6(%arg0: i32, %arg1: memref<1x8xi32, #tpu.memory_space<smem>>) -> (i32, i32) {
    %c0_i32 = arith.constant 0 : i32
    %c0_i32_0 = arith.constant 0 : i32
    %c0_i32_1 = arith.constant 0 : i32
    return %c0_i32, %c0_i32_0 : i32, i32
  }
  func.func @transform_7(%arg0: i32, %arg1: memref<1x8xi32, #tpu.memory_space<smem>>) -> (i32, i32) {
    %c0_i32 = arith.constant 0 : i32
    %c0_i32_0 = arith.constant 0 : i32
    %c0_i32_1 = arith.constant 0 : i32
    return %c0_i32, %c0_i32_0 : i32, i32
  }
  func.func @transform_8(%arg0: i32, %arg1: memref<1x8xi32, #tpu.memory_space<smem>>) -> (i32, i32) {
    %c0_i32 = arith.constant 0 : i32
    %c0_i32_0 = arith.constant 0 : i32
    %c0_i32_1 = arith.constant 0 : i32
    return %c0_i32, %c0_i32_0 : i32, i32
  }
  func.func @transform_9(%arg0: i32, %arg1: memref<1x8xi32, #tpu.memory_space<smem>>) -> (i32, i32) {
    %c0_i32 = arith.constant 0 : i32
    %c0_i32_0 = arith.constant 0 : i32
    %c0_i32_1 = arith.constant 0 : i32
    return %c0_i32, %c0_i32_0 : i32, i32
  }
  func.func @transform_10(%arg0: i32, %arg1: memref<1x8xi32, #tpu.memory_space<smem>>) -> (i32, i32) {
    %c0_i32 = arith.constant 0 : i32
    %c0_i32_0 = arith.constant 0 : i32
    %c0_i32_1 = arith.constant 0 : i32
    return %c0_i32, %c0_i32_0 : i32, i32
  }
  func.func @transform_11(%arg0: i32, %arg1: memref<1x8xi32, #tpu.memory_space<smem>>) -> (i32, i32, i32) {
    %c0_i32 = arith.constant 0 : i32
    %c0_i32_0 = arith.constant 0 : i32
    %c0_i32_1 = arith.constant 0 : i32
    return %arg0, %c0_i32, %c0_i32_0 : i32, i32, i32
  }
  func.func @transform_12(%arg0: i32, %arg1: memref<1x8xi32, #tpu.memory_space<smem>>) -> (i32, i32) {
    %c0_i32 = arith.constant 0 : i32
    %c0_i32_0 = arith.constant 0 : i32
    %c0_i32_1 = arith.constant 0 : i32
    return %c0_i32, %c0_i32_0 : i32, i32
  }
}

</mosaic_0001>

<llo_original>
// kernel: generator_forward_seq.1
$region0: #{generator_forward_seq.1}
  #allocation0 [shape = 'u32[]', space=smem, size = 0x4, offset = 0x4, fixed_abs, tag = 'smem constant byte address 0x4 - core index']
  #allocation1 [shape = 'u32[144,128]{1,0:T(1,128)}', space=vmem, size = 0x12000, scoped, tag = 'internal scratch']
  #allocation2 [shape = 'f32[8,128]{1,0:T(8,128)}', space=vmem, size = 0x1000, scoped, tag = 'scratch operand']
  #allocation3 [shape = 's32[1]{0}', space=sflag, size = 0x4, scoped, tag = 'scoped memory for generator_forward_seq.1']
  #allocation4 [shape = 'u8[512]{0}', space=smem, size = 0x200, scoped, tag = 'prefetched SMEM operand 0']
  %s0 = inlined_call_operand.vmem [shape: s32[1,8], index: 0, kind: input, shape index: {}]
  %s1 = inlined_call_operand.hbm [shape: f32[256,128], index: 1, kind: input, shape index: {}]
  %s2 = inlined_call_operand.vmem [shape: f32[8,128], index: 2, kind: input, shape index: {}]
  %s3 = inlined_call_operand.vmem [shape: f32[8,128], index: 3, kind: input, shape index: {}]
  %s4 = inlined_call_operand.hbm [shape: bf16[256,256], index: 4, kind: input, shape index: {}]
  %s5 = inlined_call_operand.hbm [shape: bf16[128,128], index: 5, kind: input, shape index: {}]
  %s6 = inlined_call_operand.hbm [shape: bf16[128,128], index: 6, kind: input, shape index: {}]
  %s7 = inlined_call_operand.vmem [shape: f32[1,256], index: 7, kind: input, shape index: {}]
  %s8 = inlined_call_operand.vmem [shape: f32[1,128], index: 8, kind: input, shape index: {}]
  %s9 = inlined_call_operand.vmem [shape: f32[1,128], index: 9, kind: input, shape index: {}]
  %s10 = inlined_call_operand.hbm [shape: bf16[128,256], index: 10, kind: input, shape index: {}]
  %s11 = inlined_call_operand.vmem [shape: f32[1,256], index: 11, kind: input, shape index: {}]
  %s12 = inlined_call_operand.hbm [shape: f32[1,8,256], index: 12, kind: output, shape index: {0}]
  %s13 = inlined_call_operand.hbm [shape: f32[8,128], index: 13, kind: output, shape index: {1}]
  %14 = xla_tuple %s12, %s13
  %s15 = sld [smem:[#allocation0]]
  $region86: #{generator_forward_seq.1} parent=0
    _
  %s17 = ssub.s32 1, %s15
  %s18 = scalar_select 0, %s17, %s15
  %s19 = sshll.u32 %s0, 4
  %s20 = int_to_ptr.vmem [resolvable:$true] %s19
  %22 = dma.vmem_to_smem %s20, 16, [#allocation4], [#allocation3]
  %23 = dma.done [#allocation3], 16
  %24 = sfence
  $region1: #{generator_forward_seq.1} parent=0
    #allocation5 [shape = 'u8[131072]{0}', space=vmem, size = 0x20000, scoped, tag = 'input window, operand 1, single buffered']
    #allocation6 [shape = 's32[1]{0}', space=sflag, size = 0x4, scoped, tag = 'scoped memory for generator_forward_seq.1']
    #allocation7 [shape = 's32[1]{0}', space=sflag, size = 0x4, scoped, tag = 'scoped memory for generator_forward_seq.1']
    #allocation8 [shape = 'u8[131072]{0}', space=vmem, size = 0x20000, scoped, tag = 'input window, operand 4, single buffered']
    #allocation9 [shape = 's32[1]{0}', space=sflag, size = 0x4, scoped, tag = 'scoped memory for generator_forward_seq.1']
    #allocation10 [shape = 'u8[32768]{0}', space=vmem, size = 0x8000, scoped, tag = 'input window, operand 5, single buffered']
    #allocation11 [shape = 'u8[32768]{0}', space=vmem, size = 0x8000, scoped, tag = 'input window, operand 6, single buffered']
    #allocation12 [shape = 's32[1]{0}', space=sflag, size = 0x4, scoped, tag = 'scoped memory for generator_forward_seq.1']
    #allocation13 [shape = 'u8[65536]{0}', space=vmem, size = 0x10000, scoped, tag = 'input window, operand 10, single buffered']
    #allocation14 [shape = 'u8[8192]{0}', space=vmem, size = 0x2000, scoped, tag = 'output window, operand 0, single buffered']
    #allocation15 [shape = 'u8[4096]{0}', space=vmem, size = 0x1000, scoped, tag = 'output window, operand 1, single buffered']
    #allocation16 [shape = 's32[1]{0}', space=sflag, size = 0x4, scoped, tag = 'scoped memory for generator_forward_seq.1']
    %25 = vsyncpa [#allocation6], 0
    %26 = vsyncpa [#allocation9], 0
    %27 = vsyncpa [#allocation12], 0
    %28 = vsyncpa [#allocation7], 0
    %29 = vsyncpa [#allocation16], 0
    // Predicated region
    $region2: #{generator_forward_seq.1} parent=1 // pred_check
      _
    $region3: #{generator_forward_seq.1} parent=1 // pred_check_branch
      %31 = sbr.rel (0) target = $region5
    $region4: #{generator_forward_seq.1} parent=1 // pred_region
      %s33 = ssub.s32 4096, 4096
      %34 = vsyncadd [#allocation6], %s33
      %s35 = sshll.u32 [#allocation5], 4
      %s36 = int_to_ptr.vmem [resolvable:$true] %s35
      %41 = dma.hbm_to_vmem [thread:$0]  %s1, 4096, %s36, [#allocation6], 128, 128, 8
    $region5: #{generator_forward_seq.1} parent=1 // pred_fallthru
      _
    // Predicated region
    $region6: #{generator_forward_seq.1} parent=1 // pred_check
      _
    $region7: #{generator_forward_seq.1} parent=1 // pred_check_branch
      %43 = sbr.rel (0) target = $region9
    $region8: #{generator_forward_seq.1} parent=1 // pred_region
      _
    $region9: #{generator_forward_seq.1} parent=1 // pred_fallthru
      _
    // Predicated region
    $region10: #{generator_forward_seq.1} parent=1 // pred_check
      _
    $region11: #{generator_forward_seq.1} parent=1 // pred_check_branch
      %45 = sbr.rel (0) target = $region13
    $region12: #{generator_forward_seq.1} parent=1 // pred_region
      _
    $region13: #{generator_forward_seq.1} parent=1 // pred_fallthru
      _
    // Predicated region
    $region14: #{generator_forward_seq.1} parent=1 // pred_check
      _
    $region15: #{generator_forward_seq.1} parent=1 // pred_check_branch
      %47 = sbr.rel (0) target = $region17
    $region16: #{generator_forward_seq.1} parent=1 // pred_region
      %s49 = ssub.s32 4096, 4096
      %50 = vsyncadd [#allocation9], %s49
      %s51 = sshll.u32 [#allocation8], 4
      %s52 = int_to_ptr.vmem [resolvable:$true] %s51
      %57 = dma.hbm_to_vmem [thread:$0]  %s4, 4096, %s52, [#allocation9], 128, 128, 8
    $region17: #{generator_forward_seq.1} parent=1 // pred_fallthru
      _
    // Predicated region
    $region18: #{generator_forward_seq.1} parent=1 // pred_check
      _
    $region19: #{generator_forward_seq.1} parent=1 // pred_check_branch
      %59 = sbr.rel (0) target = $region21
    $region20: #{generator_forward_seq.1} parent=1 // pred_region
      %s61 = ssub.s32 1024, 1024
      %62 = vsyncadd [#allocation9], %s61
      %s63 = sshll.u32 [#allocation10], 4
      %s64 = int_to_ptr.vmem [resolvable:$true] %s63
      %69 = dma.hbm_to_vmem [thread:$0]  %s5, 1024, %s64, [#allocation9], 64, 64, 4
    $region21: #{generator_forward_seq.1} parent=1 // pred_fallthru
      _
    // Predicated region
    $region22: #{generator_forward_seq.1} parent=1 // pred_check
      _
    $region23: #{generator_forward_seq.1} parent=1 // pred_check_branch
      %71 = sbr.rel (0) target = $region25
    $region24: #{generator_forward_seq.1} parent=1 // pred_region
      %s73 = ssub.s32 1024, 1024
      %74 = vsyncadd [#allocation12], %s73
      %s75 = sshll.u32 [#allocation11], 4
      %s76 = int_to_ptr.vmem [resolvable:$true] %s75
      %81 = dma.hbm_to_vmem [thread:$0]  %s6, 1024, %s76, [#allocation12], 64, 64, 4
    $region25: #{generator_forward_seq.1} parent=1 // pred_fallthru
      _
    // Predicated region
    $region26: #{generator_forward_seq.1} parent=1 // pred_check
      _
    $region27: #{generator_forward_seq.1} parent=1 // pred_check_branch
      %83 = sbr.rel (0) target = $region29
    $region28: #{generator_forward_seq.1} parent=1 // pred_region
      _
    $region29: #{generator_forward_seq.1} parent=1 // pred_fallthru
      _
    // Predicated region
    $region30: #{generator_forward_seq.1} parent=1 // pred_check
      _
    $region31: #{generator_forward_seq.1} parent=1 // pred_check_branch
      %85 = sbr.rel (0) target = $region33
    $region32: #{generator_forward_seq.1} parent=1 // pred_region
      _
    $region33: #{generator_forward_seq.1} parent=1 // pred_fallthru
      _
    // Predicated region
    $region34: #{generator_forward_seq.1} parent=1 // pred_check
      _
    $region35: #{generator_forward_seq.1} parent=1 // pred_check_branch
      %87 = sbr.rel (0) target = $region37
    $region36: #{generator_forward_seq.1} parent=1 // pred_region
      _
    $region37: #{generator_forward_seq.1} parent=1 // pred_fallthru
      _
    // Predicated region
    $region38: #{generator_forward_seq.1} parent=1 // pred_check
      _
    $region39: #{generator_forward_seq.1} parent=1 // pred_check_branch
      %89 = sbr.rel (0) target = $region41
    $region40: #{generator_forward_seq.1} parent=1 // pred_region
      %s91 = ssub.s32 2048, 2048
      %92 = vsyncadd [#allocation12], %s91
      %s93 = sshll.u32 [#allocation13], 4
      %s94 = int_to_ptr.vmem [resolvable:$true] %s93
      %99 = dma.hbm_to_vmem [thread:$0]  %s10, 2048, %s94, [#allocation12], 128, 128, 8
    $region41: #{generator_forward_seq.1} parent=1 // pred_fallthru
      _
    // Predicated region
    $region42: #{generator_forward_seq.1} parent=1 // pred_check
      _
    $region43: #{generator_forward_seq.1} parent=1 // pred_check_branch
      %101 = sbr.rel (0) target = $region45
    $region44: #{generator_forward_seq.1} parent=1 // pred_region
      _
    $region45: #{generator_forward_seq.1} parent=1 // pred_fallthru
      _
    // Predicated region
    $region46: #{generator_forward_seq.1} parent=1 // pred_check
      _
    $region47: #{generator_forward_seq.1} parent=1 // pred_check_branch
      %103 = sbr.rel (0) target = $region49
    $region48: #{generator_forward_seq.1} parent=1 // pred_region
      %104 = dma.done [#allocation6], 4096
    $region49: #{generator_forward_seq.1} parent=1 // pred_fallthru
      _
    // Predicated region
    $region50: #{generator_forward_seq.1} parent=1 // pred_check
      _
    $region51: #{generator_forward_seq.1} parent=1 // pred_check_branch
      %106 = sbr.rel (0) target = $region53
    $region52: #{generator_forward_seq.1} parent=1 // pred_region
      %107 = dma.done [#allocation9], 4096
    $region53: #{generator_forward_seq.1} parent=1 // pred_fallthru
      _
    // Predicated region
    $region54: #{generator_forward_seq.1} parent=1 // pred_check
      _
    $region55: #{generator_forward_seq.1} parent=1 // pred_check_branch
      %109 = sbr.rel (0) target = $region57
    $region56: #{generator_forward_seq.1} parent=1 // pred_region
      %110 = dma.done [#allocation9], 1024
    $region57: #{generator_forward_seq.1} parent=1 // pred_fallthru
      _
    // Predicated region
    $region58: #{generator_forward_seq.1} parent=1 // pred_check
      _
    $region59: #{generator_forward_seq.1} parent=1 // pred_check_branch
      %112 = sbr.rel (0) target = $region61
    $region60: #{generator_forward_seq.1} parent=1 // pred_region
      %113 = dma.done [#allocation12], 1024
    $region61: #{generator_forward_seq.1} parent=1 // pred_fallthru
      _
    // Predicated region
    $region62: #{generator_forward_seq.1} parent=1 // pred_check
      _
    $region63: #{generator_forward_seq.1} parent=1 // pred_check_branch
      %115 = sbr.rel (0) target = $region65
    $region64: #{generator_forward_seq.1} parent=1 // pred_region
      %116 = dma.done [#allocation12], 2048
    $region65: #{generator_forward_seq.1} parent=1 // pred_fallthru
      _
    %p118 = scmp.eq.s32.totalorder 0, 0
    // Predicated region
    $region66: #{generator_forward_seq.1} parent=1 // pred_check
      %p119 = pneg %p118
    $region67: #{generator_forward_seq.1} parent=1 // pred_check_branch
      %121 = sbr.rel (%p119) target = $region69
    $region68: #{generator_forward_seq.1} parent=1 // pred_region
      %v122 = vld [vmem:[%s3] sm:$0xff]
      %123 = vst [vmem:[#allocation15] sm:$0xff] %v122
    $region69: #{generator_forward_seq.1} parent=1 // pred_fallthru
      _
    %s124 = smul.u32 0, 128
    %s125 = sld [smem:[#allocation4 + %s124]]
    %s126 = scalar_lea.vmem [#allocation5], %s125
    %v127 = vld [vmem:[%s126] sm:$0x1]
    %128 = vst [vmem:[#allocation2] sm:$0x1] %v127
    %s129 = sadd.s32 %s124, 1
    %s130 = sld [smem:[#allocation4 + %s129]]
    %s131 = scalar_lea.vmem [#allocation5], %s130
    %v132 = vld [vmem:[%s131] sm:$0x1]
    %133 = vst [vmem:[#allocation2 + $0x1] sm:$0x1] %v132
    %s134 = sadd.s32 %s124, 2
    %s135 = sld [smem:[#allocation4 + %s134]]
    %s136 = scalar_lea.vmem [#allocation5], %s135
    %v137 = vld [vmem:[%s136] sm:$0x1]
    %138 = vst [vmem:[#allocation2 + $0x2] sm:$0x1] %v137
    %s139 = sadd.s32 %s124, 3
    %s140 = sld [smem:[#allocation4 + %s139]]
    %s141 = scalar_lea.vmem [#allocation5], %s140
    %v142 = vld [vmem:[%s141] sm:$0x1]
    %143 = vst [vmem:[#allocation2 + $0x3] sm:$0x1] %v142
    %s144 = sadd.s32 %s124, 4
    %s145 = sld [smem:[#allocation4 + %s144]]
    %s146 = scalar_lea.vmem [#allocation5], %s145
    %v147 = vld [vmem:[%s146] sm:$0x1]
    %148 = vst [vmem:[#allocation2 + $0x4] sm:$0x1] %v147
    %s149 = sadd.s32 %s124, 5
    %s150 = sld [smem:[#allocation4 + %s149]]
    %s151 = scalar_lea.vmem [#allocation5], %s150
    %v152 = vld [vmem:[%s151] sm:$0x1]
    %153 = vst [vmem:[#allocation2 + $0x5] sm:$0x1] %v152
    %s154 = sadd.s32 %s124, 6
    %s155 = sld [smem:[#allocation4 + %s154]]
    %s156 = scalar_lea.vmem [#allocation5], %s155
    %v157 = vld [vmem:[%s156] sm:$0x1]
    %158 = vst [vmem:[#allocation2 + $0x6] sm:$0x1] %v157
    %s159 = sadd.s32 %s124, 7
    %s160 = sld [smem:[#allocation4 + %s159]]
    %s161 = scalar_lea.vmem [#allocation5], %s160
    %v162 = vld [vmem:[%s161] sm:$0x1]
    %163 = vst [vmem:[#allocation2 + $0x7] sm:$0x1] %v162
    %v164 = vld [vmem:[#allocation2] sm:$0xff]
    %v165 = vpack.c.bf16 %v164, %v164
    %v166 = vld [vmem:[#allocation15] sm:$0xff]
    %v167 = vld [vmem:[%s2] sm:$0xff]
    %v168 = vadd.f32 %v166, %v167
    %v169 = vpack.c.bf16 %v168, %v168
    %v170 = vld [vmem:[#allocation8] sm:$0xff]
    %v171 = vld [vmem:[#allocation8 + $0x8] sm:$0xff]
    %v172 = vld [vmem:[#allocation8 + $0x10] sm:$0xff]
    %v173 = vld [vmem:[#allocation8 + $0x18] sm:$0xff]
    %v174 = vld [vmem:[#allocation8 + $0x20] sm:$0xff]
    %v175 = vld [vmem:[#allocation8 + $0x28] sm:$0xff]
    %v176 = vld [vmem:[#allocation8 + $0x30] sm:$0xff]
    %v177 = vld [vmem:[#allocation8 + $0x38] sm:$0xff]
    %v178 = vld [vmem:[#allocation8 + $0x40] sm:$0xff]
    %v179 = vld [vmem:[#allocation8 + $0x48] sm:$0xff]
    %v180 = vld [vmem:[#allocation8 + $0x50] sm:$0xff]
    %v181 = vld [vmem:[#allocation8 + $0x58] sm:$0xff]
    %v182 = vld [vmem:[#allocation8 + $0x60] sm:$0xff]
    %v183 = vld [vmem:[#allocation8 + $0x68] sm:$0xff]
    %v184 = vld [vmem:[#allocation8 + $0x70] sm:$0xff]
    %v185 = vld [vmem:[#allocation8 + $0x78] sm:$0xff]
    %v186 = vld [vmem:[#allocation8 + $0x80] sm:$0xff]
    %v187 = vld [vmem:[#allocation8 + $0x88] sm:$0xff]
    %v188 = vld [vmem:[#allocation8 + $0x90] sm:$0xff]
    %v189 = vld [vmem:[#allocation8 + $0x98] sm:$0xff]
    %v190 = vld [vmem:[#allocation8 + $0xa0] sm:$0xff]
    %v191 = vld [vmem:[#allocation8 + $0xa8] sm:$0xff]
    %v192 = vld [vmem:[#allocation8 + $0xb0] sm:$0xff]
    %v193 = vld [vmem:[#allocation8 + $0xb8] sm:$0xff]
    %v194 = vld [vmem:[#allocation8 + $0xc0] sm:$0xff]
    %v195 = vld [vmem:[#allocation8 + $0xc8] sm:$0xff]
    %v196 = vld [vmem:[#allocation8 + $0xd0] sm:$0xff]
    %v197 = vld [vmem:[#allocation8 + $0xd8] sm:$0xff]
    %v198 = vld [vmem:[#allocation8 + $0xe0] sm:$0xff]
    %v199 = vld [vmem:[#allocation8 + $0xe8] sm:$0xff]
    %v200 = vld [vmem:[#allocation8 + $0xf0] sm:$0xff]
    %v201 = vld [vmem:[#allocation8 + $0xf8] sm:$0xff]
    %v202 = vld [vmem:[%s7] sm:$0x3]
    %v204 = vlaneseq
    %v205 = vshrl.u32 %v204, 7
    %v206 = vsub.s32 0, %v205
    %v207 = vrot.slane %v202, %v206
    %v208 = vlaneseq
    %v209 = vshrl.u32 %v208, 7
    %v210 = vsub.s32 1, %v209
    %v211 = vrot.slane %v202, %v210
    %v246 = vunpack.c.l.b16 %v170
    %v247 = vunpack.c.h.b16 %v170
    %v248 = vunpack.c.l.b16 %v171
    %v249 = vunpack.c.h.b16 %v171
    %v250 = vunpack.c.l.b16 %v172
    %v251 = vunpack.c.h.b16 %v172
    %v252 = vunpack.c.l.b16 %v173
    %v253 = vunpack.c.h.b16 %v173
    %v254 = vunpack.c.l.b16 %v174
    %v255 = vunpack.c.h.b16 %v174
    %v256 = vunpack.c.l.b16 %v175
    %v257 = vunpack.c.h.b16 %v175
    %v258 = vunpack.c.l.b16 %v176
    %v259 = vunpack.c.h.b16 %v176
    %v260 = vunpack.c.l.b16 %v177
    %v261 = vunpack.c.h.b16 %v177
    %v262 = vunpack.c.l.b16 %v178
    %v263 = vunpack.c.h.b16 %v178
    %v264 = vunpack.c.l.b16 %v179
    %v265 = vunpack.c.h.b16 %v179
    %v266 = vunpack.c.l.b16 %v180
    %v267 = vunpack.c.h.b16 %v180
    %v268 = vunpack.c.l.b16 %v181
    %v269 = vunpack.c.h.b16 %v181
    %v270 = vunpack.c.l.b16 %v182
    %v271 = vunpack.c.h.b16 %v182
    %v272 = vunpack.c.l.b16 %v183
    %v273 = vunpack.c.h.b16 %v183
    %v274 = vunpack.c.l.b16 %v184
    %v275 = vunpack.c.h.b16 %v184
    %v276 = vunpack.c.l.b16 %v185
    %v277 = vunpack.c.h.b16 %v185
    %v278 = vunpack.c.l.b16 %v186
    %v279 = vunpack.c.h.b16 %v186
    %v280 = vunpack.c.l.b16 %v187
    %v281 = vunpack.c.h.b16 %v187
    %v282 = vunpack.c.l.b16 %v188
    %v283 = vunpack.c.h.b16 %v188
    %v284 = vunpack.c.l.b16 %v189
    %v285 = vunpack.c.h.b16 %v189
    %v286 = vunpack.c.l.b16 %v190
    %v287 = vunpack.c.h.b16 %v190
    %v288 = vunpack.c.l.b16 %v191
    %v289 = vunpack.c.h.b16 %v191
    %v290 = vunpack.c.l.b16 %v192
    %v291 = vunpack.c.h.b16 %v192
    %v292 = vunpack.c.l.b16 %v193
    %v293 = vunpack.c.h.b16 %v193
    %v294 = vunpack.c.l.b16 %v194
    %v295 = vunpack.c.h.b16 %v194
    %v296 = vunpack.c.l.b16 %v195
    %v297 = vunpack.c.h.b16 %v195
    %v298 = vunpack.c.l.b16 %v196
    %v299 = vunpack.c.h.b16 %v196
    %v300 = vunpack.c.l.b16 %v197
    %v301 = vunpack.c.h.b16 %v197
    %v302 = vunpack.c.l.b16 %v198
    %v303 = vunpack.c.h.b16 %v198
    %v304 = vunpack.c.l.b16 %v199
    %v305 = vunpack.c.h.b16 %v199
    %v306 = vunpack.c.l.b16 %v200
    %v307 = vunpack.c.h.b16 %v200
    %v308 = vunpack.c.l.b16 %v201
    %v309 = vunpack.c.h.b16 %v201
    %v310 = vpack.c.b16 %v248, %v246
    %v311 = vpack.c.b16 %v249, %v247
    %v312 = vpack.c.b16 %v252, %v250
    %v313 = vpack.c.b16 %v253, %v251
    %v314 = vpack.c.b16 %v256, %v254
    %v315 = vpack.c.b16 %v257, %v255
    %v316 = vpack.c.b16 %v260, %v258
    %v317 = vpack.c.b16 %v261, %v259
    %v318 = vpack.c.b16 %v264, %v262
    %v319 = vpack.c.b16 %v265, %v263
    %v320 = vpack.c.b16 %v268, %v266
    %v321 = vpack.c.b16 %v269, %v267
    %v322 = vpack.c.b16 %v272, %v270
    %v323 = vpack.c.b16 %v273, %v271
    %v324 = vpack.c.b16 %v276, %v274
    %v325 = vpack.c.b16 %v277, %v275
    %v326 = vpack.c.b16 %v280, %v278
    %v327 = vpack.c.b16 %v281, %v279
    %v328 = vpack.c.b16 %v284, %v282
    %v329 = vpack.c.b16 %v285, %v283
    %v330 = vpack.c.b16 %v288, %v286
    %v331 = vpack.c.b16 %v289, %v287
    %v332 = vpack.c.b16 %v292, %v290
    %v333 = vpack.c.b16 %v293, %v291
    %v334 = vpack.c.b16 %v296, %v294
    %v335 = vpack.c.b16 %v297, %v295
    %v336 = vpack.c.b16 %v300, %v298
    %v337 = vpack.c.b16 %v301, %v299
    %v338 = vpack.c.b16 %v304, %v302
    %v339 = vpack.c.b16 %v305, %v303
    %v340 = vpack.c.b16 %v308, %v306
    %v341 = vpack.c.b16 %v309, %v307
    %374 = vmatprep.subr.bf16.mxu0 %v325
    %375 = vmatpush1.bf16.msra.mxu0 %v324
    %376 = vmatprep.subr.bf16.mxu0 %v323
    %377 = vmatpush1.bf16.msra.mxu0 %v322
    %378 = vmatprep.subr.bf16.mxu0 %v321
    %379 = vmatpush1.bf16.msra.mxu0 %v320
    %380 = vmatprep.subr.bf16.mxu0 %v319
    %381 = vmatpush1.bf16.msra.mxu0 %v318
    %382 = vmatprep.subr.bf16.mxu0 %v317
    %383 = vmatpush1.bf16.msra.mxu0 %v316
    %384 = vmatprep.subr.bf16.mxu0 %v315
    %385 = vmatpush1.bf16.msra.mxu0 %v314
    %386 = vmatprep.subr.bf16.mxu0 %v313
    %387 = vmatpush1.bf16.msra.mxu0 %v312
    %388 = vmatprep.subr.bf16.mxu0 %v311
    %389 = vmatpush1.bf16.msra.mxu0 %v310
    %390 = vmatprep.subr.bf16.mxu0 %v341
    %391 = vmatpush2.bf16.msra.mxu0 %v340
    %392 = vmatprep.subr.bf16.mxu0 %v339
    %393 = vmatpush2.bf16.msra.mxu0 %v338
    %394 = vmatprep.subr.bf16.mxu0 %v337
    %395 = vmatpush2.bf16.msra.mxu0 %v336
    %396 = vmatprep.subr.bf16.mxu0 %v335
    %397 = vmatpush2.bf16.msra.mxu0 %v334
    %398 = vmatprep.subr.bf16.mxu0 %v333
    %399 = vmatpush2.bf16.msra.mxu0 %v332
    %400 = vmatprep.subr.bf16.mxu0 %v331
    %401 = vmatpush2.bf16.msra.mxu0 %v330
    %402 = vmatprep.subr.bf16.mxu0 %v329
    %403 = vmatpush2.bf16.msra.mxu0 %v328
    %404 = vmatprep.subr.bf16.mxu0 %v327
    %405 = vmatpush2.bf16.msra.mxu0 %v326
    %406 = vmatprep.mubr.bf16.mxu0 %v169
    %407 = vmatmul.mubr.bf16.gmra.mxu0 %v165
    %v408 = vpop.f32.mrf.mxu0
    %v409 = vadd.f32 %v207, %v408
    %v410 = vpop.f32.mrf.mxu0
    %v411 = vadd.f32 %v211, %v410
    %v412 = vpop.f32.mrf.mxu0
    %v413 = vpop.f32.mrf.mxu0
    %414 = vdwg.mxu0
    %v415 = vxor.u32 %v409, 2147483648
    %v416 = vmul.f32 %v415, 1.442695
    %v417 = vpow.pop %v416
    %v418 = vadd.f32 %v417, 1.0
    %v419 = vrcp.pop %v418
    %v420 = vmul.f32 1.0, %v419
    %v421 = vxor.u32 %v411, 2147483648
    %v422 = vmul.f32 %v421, 1.442695
    %v423 = vpow.pop %v422
    %v424 = vadd.f32 %v423, 1.0
    %v425 = vrcp.pop %v424
    %v426 = vmul.f32 1.0, %v425
    %v427 = vld [vmem:[#allocation10] sm:$0xf]
    %v428 = vld [vmem:[#allocation10 + $0x4] sm:$0xf]
    %v429 = vld [vmem:[#allocation10 + $0x8] sm:$0xf]
    %v430 = vld [vmem:[#allocation10 + $0xc] sm:$0xf]
    %v431 = vld [vmem:[#allocation10 + $0x10] sm:$0xf]
    %v432 = vld [vmem:[#allocation10 + $0x14] sm:$0xf]
    %v433 = vld [vmem:[#allocation10 + $0x18] sm:$0xf]
    %v434 = vld [vmem:[#allocation10 + $0x1c] sm:$0xf]
    %v435 = vld [vmem:[#allocation10 + $0x20] sm:$0xf]
    %v436 = vld [vmem:[#allocation10 + $0x24] sm:$0xf]
    %v437 = vld [vmem:[#allocation10 + $0x28] sm:$0xf]
    %v438 = vld [vmem:[#allocation10 + $0x2c] sm:$0xf]
    %v439 = vld [vmem:[#allocation10 + $0x30] sm:$0xf]
    %v440 = vld [vmem:[#allocation10 + $0x34] sm:$0xf]
    %v441 = vld [vmem:[#allocation10 + $0x38] sm:$0xf]
    %v442 = vld [vmem:[#allocation10 + $0x3c] sm:$0xf]
    %v443 = vld [vmem:[%s8] sm:$0x1]
    %v445 = vlaneseq
    %v446 = vshrl.u32 %v445, 7
    %v447 = vsub.s32 0, %v446
    %v448 = vrot.slane %v443, %v447
    %v466 = vunpack.c.l.b16 %v427
    %v467 = vunpack.c.l.b16 %v428
    %v468 = vunpack.c.l.b16 %v429
    %v469 = vunpack.c.l.b16 %v430
    %v470 = vunpack.c.l.b16 %v431
    %v471 = vunpack.c.l.b16 %v432
    %v472 = vunpack.c.l.b16 %v433
    %v473 = vunpack.c.l.b16 %v434
    %v474 = vunpack.c.l.b16 %v435
    %v475 = vunpack.c.l.b16 %v436
    %v476 = vunpack.c.l.b16 %v437
    %v477 = vunpack.c.l.b16 %v438
    %v478 = vunpack.c.l.b16 %v439
    %v479 = vunpack.c.l.b16 %v440
    %v480 = vunpack.c.l.b16 %v441
    %v481 = vunpack.c.l.b16 %v442
    %v482 = vpack.c.b16 %v467, %v466
    %v483 = vpack.c.b16 %v469, %v468
    %v484 = vpack.c.b16 %v471, %v470
    %v485 = vpack.c.b16 %v473, %v472
    %v486 = vpack.c.b16 %v475, %v474
    %v487 = vpack.c.b16 %v477, %v476
    %v488 = vpack.c.b16 %v479, %v478
    %v489 = vpack.c.b16 %v481, %v480
    %498 = vmatprep.subr.bf16.mxu0 0
    %499 = vmatpush1.bf16.msra.mxu0 %v489
    %500 = vmatprep.subr.bf16.mxu0 0
    %501 = vmatpush1.bf16.msra.mxu0 %v488
    %502 = vmatprep.subr.bf16.mxu0 0
    %503 = vmatpush1.bf16.msra.mxu0 %v487
    %504 = vmatprep.subr.bf16.mxu0 0
    %505 = vmatpush1.bf16.msra.mxu0 %v486
    %506 = vmatprep.subr.bf16.mxu0 0
    %507 = vmatpush1.bf16.msra.mxu0 %v485
    %508 = vmatprep.subr.bf16.mxu0 0
    %509 = vmatpush1.bf16.msra.mxu0 %v484
    %510 = vmatprep.subr.bf16.mxu0 0
    %511 = vmatpush1.bf16.msra.mxu0 %v483
    %512 = vmatprep.subr.bf16.mxu0 0
    %513 = vmatpush1.bf16.msra.mxu0 %v482
    %514 = vmatprep.subr.bf16.mxu0 0
    %515 = vmatpush2.bf16.msra.mxu0 0
    %516 = vmatprep.subr.bf16.mxu0 0
    %517 = vmatpush2.bf16.msra.mxu0 0
    %518 = vmatprep.subr.bf16.mxu0 0
    %519 = vmatpush2.bf16.msra.mxu0 0
    %520 = vmatprep.subr.bf16.mxu0 0
    %521 = vmatpush2.bf16.msra.mxu0 0
    %522 = vmatprep.subr.bf16.mxu0 0
    %523 = vmatpush2.bf16.msra.mxu0 0
    %524 = vmatprep.subr.bf16.mxu0 0
    %525 = vmatpush2.bf16.msra.mxu0 0
    %526 = vmatprep.subr.bf16.mxu0 0
    %527 = vmatpush2.bf16.msra.mxu0 0
    %528 = vmatprep.subr.bf16.mxu0 0
    %529 = vmatpush2.bf16.msra.mxu0 0
    %530 = vmatprep.mubr.bf16.mxu0 0
    %531 = vmatmul.mubr.bf16.gmra.mxu0 %v165
    %v532 = vpop.f32.mrf.mxu0
    %v533 = vadd.f32 %v448, %v532
    %v534 = vpop.f32.mrf.mxu0
    %v535 = vpop.f32.mrf.mxu0
    %v536 = vpop.f32.mrf.mxu0
    %537 = vdwg.mxu0
    %v538 = vld [vmem:[#allocation11] sm:$0xf]
    %v539 = vld [vmem:[#allocation11 + $0x4] sm:$0xf]
    %v540 = vld [vmem:[#allocation11 + $0x8] sm:$0xf]
    %v541 = vld [vmem:[#allocation11 + $0xc] sm:$0xf]
    %v542 = vld [vmem:[#allocation11 + $0x10] sm:$0xf]
    %v543 = vld [vmem:[#allocation11 + $0x14] sm:$0xf]
    %v544 = vld [vmem:[#allocation11 + $0x18] sm:$0xf]
    %v545 = vld [vmem:[#allocation11 + $0x1c] sm:$0xf]
    %v546 = vld [vmem:[#allocation11 + $0x20] sm:$0xf]
    %v547 = vld [vmem:[#allocation11 + $0x24] sm:$0xf]
    %v548 = vld [vmem:[#allocation11 + $0x28] sm:$0xf]
    %v549 = vld [vmem:[#allocation11 + $0x2c] sm:$0xf]
    %v550 = vld [vmem:[#allocation11 + $0x30] sm:$0xf]
    %v551 = vld [vmem:[#allocation11 + $0x34] sm:$0xf]
    %v552 = vld [vmem:[#allocation11 + $0x38] sm:$0xf]
    %v553 = vld [vmem:[#allocation11 + $0x3c] sm:$0xf]
    %v554 = vld [vmem:[%s9] sm:$0x1]
    %v556 = vlaneseq
    %v557 = vshrl.u32 %v556, 7
    %v558 = vsub.s32 0, %v557
    %v559 = vrot.slane %v554, %v558
    %v577 = vunpack.c.l.b16 %v538
    %v578 = vunpack.c.l.b16 %v539
    %v579 = vunpack.c.l.b16 %v540
    %v580 = vunpack.c.l.b16 %v541
    %v581 = vunpack.c.l.b16 %v542
    %v582 = vunpack.c.l.b16 %v543
    %v583 = vunpack.c.l.b16 %v544
    %v584 = vunpack.c.l.b16 %v545
    %v585 = vunpack.c.l.b16 %v546
    %v586 = vunpack.c.l.b16 %v547
    %v587 = vunpack.c.l.b16 %v548
    %v588 = vunpack.c.l.b16 %v549
    %v589 = vunpack.c.l.b16 %v550
    %v590 = vunpack.c.l.b16 %v551
    %v591 = vunpack.c.l.b16 %v552
    %v592 = vunpack.c.l.b16 %v553
    %v593 = vpack.c.b16 %v578, %v577
    %v594 = vpack.c.b16 %v580, %v579
    %v595 = vpack.c.b16 %v582, %v581
    %v596 = vpack.c.b16 %v584, %v583
    %v597 = vpack.c.b16 %v586, %v585
    %v598 = vpack.c.b16 %v588, %v587
    %v599 = vpack.c.b16 %v590, %v589
    %v600 = vpack.c.b16 %v592, %v591
    %609 = vmatprep.subr.bf16.mxu0 0
    %610 = vmatpush1.bf16.msra.mxu0 %v600
    %611 = vmatprep.subr.bf16.mxu0 0
    %612 = vmatpush1.bf16.msra.mxu0 %v599
    %613 = vmatprep.subr.bf16.mxu0 0
    %614 = vmatpush1.bf16.msra.mxu0 %v598
    %615 = vmatprep.subr.bf16.mxu0 0
    %616 = vmatpush1.bf16.msra.mxu0 %v597
    %617 = vmatprep.subr.bf16.mxu0 0
    %618 = vmatpush1.bf16.msra.mxu0 %v596
    %619 = vmatprep.subr.bf16.mxu0 0
    %620 = vmatpush1.bf16.msra.mxu0 %v595
    %621 = vmatprep.subr.bf16.mxu0 0
    %622 = vmatpush1.bf16.msra.mxu0 %v594
    %623 = vmatprep.subr.bf16.mxu0 0
    %624 = vmatpush1.bf16.msra.mxu0 %v593
    %625 = vmatprep.subr.bf16.mxu0 0
    %626 = vmatpush2.bf16.msra.mxu0 0
    %627 = vmatprep.subr.bf16.mxu0 0
    %628 = vmatpush2.bf16.msra.mxu0 0
    %629 = vmatprep.subr.bf16.mxu0 0
    %630 = vmatpush2.bf16.msra.mxu0 0
    %631 = vmatprep.subr.bf16.mxu0 0
    %632 = vmatpush2.bf16.msra.mxu0 0
    %633 = vmatprep.subr.bf16.mxu0 0
    %634 = vmatpush2.bf16.msra.mxu0 0
    %635 = vmatprep.subr.bf16.mxu0 0
    %636 = vmatpush2.bf16.msra.mxu0 0
    %637 = vmatprep.subr.bf16.mxu0 0
    %638 = vmatpush2.bf16.msra.mxu0 0
    %639 = vmatprep.subr.bf16.mxu0 0
    %640 = vmatpush2.bf16.msra.mxu0 0
    %641 = vmatprep.mubr.bf16.mxu0 0
    %642 = vmatmul.mubr.bf16.gmra.mxu0 %v169
    %v643 = vpop.f32.mrf.mxu0
    %v644 = vadd.f32 %v559, %v643
    %v645 = vpop.f32.mrf.mxu0
    %v646 = vpop.f32.mrf.mxu0
    %v647 = vpop.f32.mrf.mxu0
    %648 = vdwg.mxu0
    %v649 = vmul.f32 %v420, %v644
    %v650 = vadd.f32 %v533, %v649
    %v651 = vtanh.pop %v650
    %v652 = vsub.f32 1.0, %v426
    %v653 = vmul.f32 %v652, %v651
    %v654 = vmul.f32 %v426, %v168
    %v655 = vadd.f32 %v653, %v654
    %656 = vst [vmem:[#allocation15] sm:$0xff] %v655
    %v657 = vpack.c.bf16 %v655, %v655
    %v658 = vld [vmem:[#allocation13] sm:$0xff]
    %v659 = vld [vmem:[#allocation13 + $0x8] sm:$0xff]
    %v660 = vld [vmem:[#allocation13 + $0x10] sm:$0xff]
    %v661 = vld [vmem:[#allocation13 + $0x18] sm:$0xff]
    %v662 = vld [vmem:[#allocation13 + $0x20] sm:$0xff]
    %v663 = vld [vmem:[#allocation13 + $0x28] sm:$0xff]
    %v664 = vld [vmem:[#allocation13 + $0x30] sm:$0xff]
    %v665 = vld [vmem:[#allocation13 + $0x38] sm:$0xff]
    %v666 = vld [vmem:[#allocation13 + $0x40] sm:$0xff]
    %v667 = vld [vmem:[#allocation13 + $0x48] sm:$0xff]
    %v668 = vld [vmem:[#allocation13 + $0x50] sm:$0xff]
    %v669 = vld [vmem:[#allocation13 + $0x58] sm:$0xff]
    %v670 = vld [vmem:[#allocation13 + $0x60] sm:$0xff]
    %v671 = vld [vmem:[#allocation13 + $0x68] sm:$0xff]
    %v672 = vld [vmem:[#allocation13 + $0x70] sm:$0xff]
    %v673 = vld [vmem:[#allocation13 + $0x78] sm:$0xff]
    %v674 = vld [vmem:[%s11] sm:$0x3]
    %v676 = vlaneseq
    %v677 = vshrl.u32 %v676, 7
    %v678 = vsub.s32 0, %v677
    %v679 = vrot.slane %v674, %v678
    %v680 = vlaneseq
    %v681 = vshrl.u32 %v680, 7
    %v682 = vsub.s32 1, %v681
    %v683 = vrot.slane %v674, %v682
    %v702 = vunpack.c.l.b16 %v658
    %v703 = vunpack.c.h.b16 %v658
    %v704 = vunpack.c.l.b16 %v659
    %v705 = vunpack.c.h.b16 %v659
    %v706 = vunpack.c.l.b16 %v660
    %v707 = vunpack.c.h.b16 %v660
    %v708 = vunpack.c.l.b16 %v661
    %v709 = vunpack.c.h.b16 %v661
    %v710 = vunpack.c.l.b16 %v662
    %v711 = vunpack.c.h.b16 %v662
    %v712 = vunpack.c.l.b16 %v663
    %v713 = vunpack.c.h.b16 %v663
    %v714 = vunpack.c.l.b16 %v664
    %v715 = vunpack.c.h.b16 %v664
    %v716 = vunpack.c.l.b16 %v665
    %v717 = vunpack.c.h.b16 %v665
    %v718 = vunpack.c.l.b16 %v666
    %v719 = vunpack.c.h.b16 %v666
    %v720 = vunpack.c.l.b16 %v667
    %v721 = vunpack.c.h.b16 %v667
    %v722 = vunpack.c.l.b16 %v668
    %v723 = vunpack.c.h.b16 %v668
    %v724 = vunpack.c.l.b16 %v669
    %v725 = vunpack.c.h.b16 %v669
    %v726 = vunpack.c.l.b16 %v670
    %v727 = vunpack.c.h.b16 %v670
    %v728 = vunpack.c.l.b16 %v671
    %v729 = vunpack.c.h.b16 %v671
    %v730 = vunpack.c.l.b16 %v672
    %v731 = vunpack.c.h.b16 %v672
    %v732 = vunpack.c.l.b16 %v673
    %v733 = vunpack.c.h.b16 %v673
    %v734 = vpack.c.b16 %v704, %v702
    %v735 = vpack.c.b16 %v705, %v703
    %v736 = vpack.c.b16 %v708, %v706
    %v737 = vpack.c.b16 %v709, %v707
    %v738 = vpack.c.b16 %v712, %v710
    %v739 = vpack.c.b16 %v713, %v711
    %v740 = vpack.c.b16 %v716, %v714
    %v741 = vpack.c.b16 %v717, %v715
    %v742 = vpack.c.b16 %v720, %v718
    %v743 = vpack.c.b16 %v721, %v719
    %v744 = vpack.c.b16 %v724, %v722
    %v745 = vpack.c.b16 %v725, %v723
    %v746 = vpack.c.b16 %v728, %v726
    %v747 = vpack.c.b16 %v729, %v727
    %v748 = vpack.c.b16 %v732, %v730
    %v749 = vpack.c.b16 %v733, %v731
    %766 = vmatprep.subr.bf16.mxu0 %v749
    %767 = vmatpush1.bf16.msra.mxu0 %v748
    %768 = vmatprep.subr.bf16.mxu0 %v747
    %769 = vmatpush1.bf16.msra.mxu0 %v746
    %770 = vmatprep.subr.bf16.mxu0 %v745
    %771 = vmatpush1.bf16.msra.mxu0 %v744
    %772 = vmatprep.subr.bf16.mxu0 %v743
    %773 = vmatpush1.bf16.msra.mxu0 %v742
    %774 = vmatprep.subr.bf16.mxu0 %v741
    %775 = vmatpush1.bf16.msra.mxu0 %v740
    %776 = vmatprep.subr.bf16.mxu0 %v739
    %777 = vmatpush1.bf16.msra.mxu0 %v738
    %778 = vmatprep.subr.bf16.mxu0 %v737
    %779 = vmatpush1.bf16.msra.mxu0 %v736
    %780 = vmatprep.subr.bf16.mxu0 %v735
    %781 = vmatpush1.bf16.msra.mxu0 %v734
    %782 = vmatprep.subr.bf16.mxu0 0
    %783 = vmatpush2.bf16.msra.mxu0 0
    %784 = vmatprep.subr.bf16.mxu0 0
    %785 = vmatpush2.bf16.msra.mxu0 0
    %786 = vmatprep.subr.bf16.mxu0 0
    %787 = vmatpush2.bf16.msra.mxu0 0
    %788 = vmatprep.subr.bf16.mxu0 0
    %789 = vmatpush2.bf16.msra.mxu0 0
    %790 = vmatprep.subr.bf16.mxu0 0
    %791 = vmatpush2.bf16.msra.mxu0 0
    %792 = vmatprep.subr.bf16.mxu0 0
    %793 = vmatpush2.bf16.msra.mxu0 0
    %794 = vmatprep.subr.bf16.mxu0 0
    %795 = vmatpush2.bf16.msra.mxu0 0
    %796 = vmatprep.subr.bf16.mxu0 0
    %797 = vmatpush2.bf16.msra.mxu0 0
    %798 = vmatprep.mubr.bf16.mxu0 0
    %799 = vmatmul.mubr.bf16.gmra.mxu0 %v657
    %v800 = vpop.f32.mrf.mxu0
    %v801 = vadd.f32 %v679, %v800
    %v802 = vpop.f32.mrf.mxu0
    %v803 = vadd.f32 %v683, %v802
    %v804 = vpop.f32.mrf.mxu0
    %v805 = vpop.f32.mrf.mxu0
    %806 = vdwg.mxu0
    %v807 = vmax.f32 %v801, %v803
    %808 = vmax.xlane.f32.xlu0 %v807
    %v809 = vpop.xlane.xlu0 %808
    %v810 = vsub.f32 %v801, %v809
    %v811 = vsub.f32 %v803, %v809
    %v812 = vmul.f32 %v810, 1.442695
    %v813 = vpow.pop %v812
    %v814 = vmul.f32 %v811, 1.442695
    %v815 = vpow.pop %v814
    %v816 = vadd.f32 %v813, %v815
    %817 = vadd.xlane.f32.xlu0 %v816
    %v818 = vpop.xlane.xlu0 %817
    %v819 = vlog2.pop %v818
    %v820 = vmul.f32 %v819, 0.6931472
    %v821 = vsub.f32 %v810, %v820
    %v822 = vsub.f32 %v811, %v820
    %823 = vst [vmem:[#allocation14] sm:$0xff] %v821
    %824 = vst [vmem:[#allocation14 + $0x8] sm:$0xff] %v822
    // Predicated region
    $region70: #{generator_forward_seq.1} parent=1 // pred_check
      _
    $region71: #{generator_forward_seq.1} parent=1 // pred_check_branch
      %826 = sbr.rel (0) target = $region73
    $region72: #{generator_forward_seq.1} parent=1 // pred_region
      %s828 = ssub.s32 256, 256
      %829 = vsyncadd [#allocation7], %s828
      %s831 = sshll.u32 [#allocation14], 4
      %s832 = int_to_ptr.vmem [resolvable:$true] %s831
      %834 = dma.vmem_to_hbm [thread:$0]  %s832, 256, %s12, [#allocation7]
    $region73: #{generator_forward_seq.1} parent=1 // pred_fallthru
      _
    // Predicated region
    $region74: #{generator_forward_seq.1} parent=1 // pred_check
      _
    $region75: #{generator_forward_seq.1} parent=1 // pred_check_branch
      %836 = sbr.rel (0) target = $region77
    $region76: #{generator_forward_seq.1} parent=1 // pred_region
      %s838 = ssub.s32 128, 128
      %839 = vsyncadd [#allocation16], %s838
      %s841 = sshll.u32 [#allocation15], 4
      %s842 = int_to_ptr.vmem [resolvable:$true] %s841
      %844 = dma.vmem_to_hbm [thread:$0]  %s842, 128, %s13, [#allocation16]
    $region77: #{generator_forward_seq.1} parent=1 // pred_fallthru
      _
    // Predicated region
    $region78: #{generator_forward_seq.1} parent=1 // pred_check
      _
    $region79: #{generator_forward_seq.1} parent=1 // pred_check_branch
      %846 = sbr.rel (0) target = $region81
    $region80: #{generator_forward_seq.1} parent=1 // pred_region
      %847 = dma.done [#allocation7], 256
    $region81: #{generator_forward_seq.1} parent=1 // pred_fallthru
      _
    // Predicated region
    $region82: #{generator_forward_seq.1} parent=1 // pred_check
      _
    $region83: #{generator_forward_seq.1} parent=1 // pred_check_branch
      %849 = sbr.rel (0) target = $region85
    $region84: #{generator_forward_seq.1} parent=1 // pred_region
      %850 = dma.done [#allocation16], 128
    $region85: #{generator_forward_seq.1} parent=1 // pred_fallthru
      _
    %851 = vsyncpa [#allocation6], 1
    %852 = vsyncpa [#allocation9], 1
    %853 = vsyncpa [#allocation12], 1
    %854 = vsyncpa [#allocation7], 1
    %855 = vsyncpa [#allocation16], 1

</llo_original>
